<compile_context>
chip_gen: v6e
topology: v6e:2x2x1
jax: 0.10.0
libtpu: 0.0.40
codegen_flags: <defaults>
</compile_context>

<pallas_src>
import jax
import jax.numpy as jnp
from jax.experimental import pallas as pl
from jax.experimental.pallas import tpu as pltpu


# ---------------------------------------------------------------------------
# Kernels: two layout variants so the lane (last) dim is always the largest
# available axis.
# ---------------------------------------------------------------------------
def _excite(pooled, w1t_ref, w2t_ref):
    """fc1 -> ReLU -> fc2 -> Hsigmoid on the (Bt, C) pooled vector."""
    h = jnp.dot(pooled, w1t_ref[...], preferred_element_type=jnp.float32)
    h = jnp.maximum(h, 0.0)                                   # ReLU
    s = jnp.dot(h, w2t_ref[...], preferred_element_type=jnp.float32)
    return jnp.clip(s + 3.0, 0.0, 6.0) * (1.0 / 6.0)          # Hsigmoid


def se_kernel_spatial_last(x_ref, w1t_ref, w2t_ref, o_ref):
    # x_ref: (Bt, C, HW) -- HW on lanes. Used when HW >= 128 or HW >= C.
    hw = x_ref.shape[-1]
    pooled = jnp.sum(x_ref[...], axis=-1) * (1.0 / hw)        # (Bt, C)
    scale = _excite(pooled, w1t_ref, w2t_ref)                 # (Bt, C)
    # Re-read the ref (cheap VMEM loads) rather than keeping one big value
    # live across the whole body.
    o_ref[...] = x_ref[...] * scale[:, :, None]


def se_kernel_channels_last(x_ref, w1t_ref, w2t_ref, o_ref):
    # x_ref: (Bt, HW, C) -- C on lanes. Used when HW < 128 and C > HW.
    hw = x_ref.shape[1]
    pooled = jnp.sum(x_ref[...], axis=1) * (1.0 / hw)         # (Bt, C) sublane reduce
    scale = _excite(pooled, w1t_ref, w2t_ref)                 # (Bt, C)
    o_ref[...] = x_ref[...] * scale[:, None, :]


# ---------------------------------------------------------------------------
# Generation-aware budgeting.
# ---------------------------------------------------------------------------
def _vmem_budget():
    """Returns (vmem_limit_cap_bytes, target_block_bytes, min_grid_steps)."""
    cap = 0
    try:
        info = pltpu.get_tpu_info()
        cap = int(getattr(info, "vmem_capacity_bytes", 0))
    except Exception:
        cap = 0
    if cap >= 96 * 1024 * 1024:
        # v5e / v6e: 128 MiB physical VMEM. The default scoped limit (16/32
        # MiB) is tiny, so the explicit override is load-bearing; big blocks
        # amortize the ~0.35us/step overhead.
        return 96 * 1024 * 1024, 12 * 1024 * 1024, 3
    # v7x (64 MiB physical) or unknown: conservative limit with Mosaic
    # headroom; aim for >=4 grid steps so both TensorCores fill a pipeline.
    return 56 * 1024 * 1024, 8 * 1024 * 1024, 4


def _pick_batch_tile(N, per_img_bytes, *, target_block_bytes, min_steps,
                     max_block_bytes, min_block_bytes):
    """Batch-tile: big enough to amortize per-step overhead, hard-capped so
    double-buffered in+out blocks fit VMEM, and shrunk (down to a ~1 MiB block
    floor) so the grid has >= min_steps iterations."""
    bt = max(1, target_block_bytes // per_img_bytes)
    bt = min(bt, N)
    bt = min(bt, max(1, max_block_bytes // per_img_bytes))     # VMEM hard cap
    want = max(1, pl.cdiv(N, min_steps))                        # pipeline fill
    floor = max(1, min_block_bytes // per_img_bytes)            # block floor
    if want < bt:
        bt = max(want, min(floor, bt))
    return int(min(bt, N))


# ---------------------------------------------------------------------------
# Wrapper.
# ---------------------------------------------------------------------------
def se_module(x, w1, w2, *, min_block_bytes=1 << 20):
    """SEModule forward.

    x : (N, C, H, W) activations.
    w1: (C//r, C)  fc1 weight, PyTorch nn.Linear (out, in) layout, no bias.
    w2: (C, C//r)  fc2 weight, PyTorch nn.Linear (out, in) layout, no bias.
    """
    N, C, H, W = x.shape
    Cr = w1.shape[0]
    HW = H * W
    itemsize = x.dtype.itemsize

    # --- layout choice: put the larger of HW / C on the lane dim ------------
    channels_last = (HW < 128) and (C > HW)
    if channels_last:
        # (N, HW, C): C on lanes. The transpose is wrapper-side layout
        # plumbing; inside a full network it would live on the producer side.
        x2 = jnp.transpose(x.reshape(N, C, HW), (0, 2, 1))
        kernel = se_kernel_channels_last
        block_of = lambda bt: (bt, HW, C)
    else:
        # (N, C, HW): HW on lanes (a free reshape of NCHW).
        x2 = x.reshape(N, C, HW)
        kernel = se_kernel_spatial_last
        block_of = lambda bt: (bt, C, HW)

    # Pre-transpose the (constant) weights once: plain row-major dots in-kernel.
    w1t = w1.T    # (C, Cr)
    w2t = w2.T    # (Cr, C)

    # --- generation-aware block / VMEM budgeting ----------------------------
    vmem_cap, target_block_bytes, min_steps = _vmem_budget()
    per_img = C * HW * itemsize
    weight_bytes = 2 * C * Cr * w1.dtype.itemsize
    headroom = 6 * 1024 * 1024                       # Mosaic internal scratch
    avail = max(vmem_cap - 2 * weight_bytes - headroom, 1 << 20)

    Bt = _pick_batch_tile(
        N, per_img,
        target_block_bytes=target_block_bytes,
        min_steps=min_steps,
        max_block_bytes=avail // 4,                  # in + out, double-buffered
        min_block_bytes=min_block_bytes)
    grid_n = pl.cdiv(N, Bt)
    block_bytes = Bt * per_img

    # Fallback when even a single-image block cannot be double-buffered
    # (e.g. C=256 at 112x112 on v7x): single-buffer the x/out pipelines
    # instead of failing to compile.
    x_pipeline = None
    if 4 * block_bytes > avail and 2 * block_bytes <= avail:
        x_pipeline = pl.Buffered(1)
    # TODO(synk): if even a single-buffered Bt=1 block exceeds VMEM, a two-pass
    # pool-then-scale structure (grid over HW chunks) would be required.

    def _x_spec(shape, imap):
        if x_pipeline is None:
            return pl.BlockSpec(shape, imap)
        return pl.BlockSpec(shape, imap, pipeline_mode=x_pipeline)

    # Request only the VMEM we need (plus slack), capped per generation.
    n_buf = 1 if x_pipeline is not None else 2
    needed = 2 * n_buf * block_bytes + 2 * weight_bytes + (4 << 20)
    vmem_limit = int(min(vmem_cap, max(needed, 32 * 1024 * 1024)))

    # Advisory: this call is a memory-bound streamer.
    cost = pl.CostEstimate(
        flops=int(2 * N * C * HW + 4 * N * C * Cr),
        transcendentals=0,
        bytes_accessed=int(2 * N * C * HW * itemsize + weight_bytes),
    )

    out2 = pl.pallas_call(
        kernel,
        out_shape=jax.ShapeDtypeStruct(x2.shape, x.dtype),
        grid_spec=pltpu.PrefetchScalarGridSpec(
            num_scalar_prefetch=0,
            grid=(grid_n,),
            in_specs=[
                _x_spec(block_of(Bt), lambda n: (n, 0, 0)),
                pl.BlockSpec((C, Cr), lambda n: (0, 0)),
                pl.BlockSpec((Cr, C), lambda n: (0, 0)),
            ],
            out_specs=_x_spec(block_of(Bt), lambda n: (n, 0, 0)),
        ),
        compiler_params=pltpu.CompilerParams(
            dimension_semantics=("parallel",),
            vmem_limit_bytes=vmem_limit,
        ),
        cost_estimate=cost,
    )(x2, w1t, w2t)

    if channels_last:
        return jnp.transpose(out2, (0, 2, 1)).reshape(N, C, H, W)
    return out2.reshape(N, C, H, W)


# ---------------------------------------------------------------------------
# Reference + tests.
# ---------------------------------------------------------------------------
def se_module_ref(x, w1, w2):
    pooled = jnp.mean(x, axis=(2, 3))
    h = jnp.maximum(pooled @ w1.T, 0.0)
    s = h @ w2.T
    scale = jnp.clip(s + 3.0, 0.0, 6.0) / 6.0
    return x * scale[:, :, None, None]


def _run_case(key, N, C, H, W, reduction, **kwargs):
    Cr = C // reduction
    kx, k1, k2 = jax.random.split(key, 3)
    x = jax.random.normal(kx, (N, C, H, W), dtype=jnp.float32)
    # PyTorch nn.Linear weight shape is (out_features, in_features).
    w1 = jax.random.normal(k1, (Cr, C), dtype=jnp.float32) * 0.1
    w2 = jax.random.normal(k2, (C, Cr), dtype=jnp.float32) * 0.1

    out = jax.block_until_ready(se_module(x, w1, w2, **kwargs))
    ref = se_module_ref(x, w1, w2)
    assert out.shape == x.shape
    assert jnp.allclose(out, ref, atol=1e-5, rtol=1e-5), (
        f"mismatch vs reference for N={N} C={C} H={H} W={W}")


if __name__ == "__main__":
    keys = jax.random.split(jax.random.PRNGKey(0), 4)
    # SEModule(in_channels=8, reduction=4); HW=256 -> spatial-last layout.
    _run_case(keys[0], N=2, C=8, H=16, W=16, reduction=4)
    # HW=64 < 128 but C=16 < HW -> still spatial-last (larger axis on lanes).
    _run_case(keys[1], N=4, C=16, H=8, W=8, reduction=4)
    # Deep-stage shape: HW=49 < 128 <= C=160 -> channels-last layout branch.
    _run_case(keys[2], N=3, C=160, H=7, W=7, reduction=4)
    # Ragged batch tiling: tiny block floor forces Bt=2 over N=5 -> multiple
    # grid steps with a masked, partially-filled last block.
    _run_case(keys[3], N=5, C=8, H=16, W=16, reduction=4, min_block_bytes=4096)
    print("KERNEL_OK")
</pallas_src>

<mosaic_0001>
module attributes {stable_mosaic.version = 11 : i64} {
  func.func @se_kernel_spatial_last(%arg0: i32, %arg1: memref<2x8x256xf32, #tpu.memory_space<vmem>>, %arg2: memref<8x2xf32, #tpu.memory_space<vmem>>, %arg3: memref<2x8xf32, #tpu.memory_space<vmem>>, %arg4: memref<2x8x256xf32, #tpu.memory_space<vmem>>) attributes {dimension_semantics = [#tpu.dimension_semantics<parallel>], iteration_bounds = array<i64: 1>, scalar_prefetch = 0 : i64, scratch_operands = 0 : i64, tpu.core_type = #tpu.core_type<tc>, window_params = [{transform_indices = @transform_0, window_bounds = array<i64: 2, 8, 256>}, {pipeline_mode = #tpu.pipeline_mode<synchronous>, transform_indices = @transform_1, window_bounds = array<i64: 8, 2>}, {pipeline_mode = #tpu.pipeline_mode<synchronous>, transform_indices = @transform_2, window_bounds = array<i64: 2, 8>}, {transform_indices = @transform_3, window_bounds = array<i64: 2, 8, 256>}]} {
    %c0 = arith.constant 0 : index
    %c0_0 = arith.constant 0 : index
    %c0_1 = arith.constant 0 : index
    %0 = vector.load %arg1[%c0, %c0_0, %c0_1] : memref<2x8x256xf32, #tpu.memory_space<vmem>>, vector<2x8x256xf32>
    %cst = arith.constant dense<0.000000e+00> : vector<2x8xf32>
    %1 = vector.multi_reduction <add>, %0, %cst [2] : vector<2x8x256xf32> to vector<2x8xf32>
    %cst_2 = arith.constant 3.906250e-03 : f32
    %2 = vector.broadcast %cst_2 : f32 to vector<2x8xf32>
    %3 = arith.mulf %1, %2 : vector<2x8xf32>
    %c0_3 = arith.constant 0 : index
    %c0_4 = arith.constant 0 : index
    %4 = vector.load %arg2[%c0_3, %c0_4] : memref<8x2xf32, #tpu.memory_space<vmem>>, vector<8x2xf32>
    %cst_5 = arith.constant dense<0.000000e+00> : vector<2x2xf32>
    %5 = tpu.matmul %3, %4, %cst_5 {dimension_numbers = #tpu.dot_dimension_numbers<[1], [0], [0], [1], [0, 0, 1, 1], [], []>} : vector<2x8xf32>, vector<8x2xf32>, vector<2x2xf32> -> vector<2x2xf32>
    %cst_6 = arith.constant 0.000000e+00 : f32
    %6 = vector.broadcast %cst_6 : f32 to vector<2x2xf32>
    %7 = arith.maximumf %5, %6 : vector<2x2xf32>
    %c0_7 = arith.constant 0 : index
    %c0_8 = arith.constant 0 : index
    %8 = vector.load %arg3[%c0_7, %c0_8] : memref<2x8xf32, #tpu.memory_space<vmem>>, vector<2x8xf32>
    %cst_9 = arith.constant dense<0.000000e+00> : vector<2x8xf32>
    %9 = tpu.matmul %7, %8, %cst_9 {dimension_numbers = #tpu.dot_dimension_numbers<[1], [0], [0], [1], [0, 0, 1, 1], [], []>} : vector<2x2xf32>, vector<2x8xf32>, vector<2x8xf32> -> vector<2x8xf32>
    %cst_10 = arith.constant 3.000000e+00 : f32
    %10 = vector.broadcast %cst_10 : f32 to vector<2x8xf32>
    %11 = arith.addf %9, %10 : vector<2x8xf32>
    %cst_11 = arith.constant 0.000000e+00 : f32
    %cst_12 = arith.constant 6.000000e+00 : f32
    %12 = vector.broadcast %cst_11 : f32 to vector<2x8xf32>
    %13 = arith.maximumf %12, %11 : vector<2x8xf32>
    %14 = vector.broadcast %cst_12 : f32 to vector<2x8xf32>
    %15 = arith.minimumf %14, %13 : vector<2x8xf32>
    %cst_13 = arith.constant 0.166666672 : f32
    %16 = vector.broadcast %cst_13 : f32 to vector<2x8xf32>
    %17 = arith.mulf %15, %16 : vector<2x8xf32>
    %c0_14 = arith.constant 0 : index
    %c0_15 = arith.constant 0 : index
    %c0_16 = arith.constant 0 : index
    %18 = vector.load %arg1[%c0_14, %c0_15, %c0_16] : memref<2x8x256xf32, #tpu.memory_space<vmem>>, vector<2x8x256xf32>
    %19 = vector.shape_cast %17 : vector<2x8xf32> to vector<2x8x1xf32>
    %20 = vector.broadcast %19 : vector<2x8x1xf32> to vector<2x8x256xf32>
    %21 = arith.mulf %18, %20 : vector<2x8x256xf32>
    %c0_17 = arith.constant 0 : index
    %c0_18 = arith.constant 0 : index
    %c0_19 = arith.constant 0 : index
    %22 = vector.load %arg4[%c0_17, %c0_18, %c0_19] : memref<2x8x256xf32, #tpu.memory_space<vmem>>, vector<2x8x256xf32>
    tpu.vector_store %arg4[%c0_17, %c0_18, %c0_19], %21 {strides = array<i32>} : memref<2x8x256xf32, #tpu.memory_space<vmem>>, vector<2x8x256xf32>,
    return
  }
  func.func @transform_0(%arg0: i32) -> (i32, i32, i32) {
    %c0_i32 = arith.constant 0 : i32
    %c0_i32_0 = arith.constant 0 : i32
    %c0_i32_1 = arith.constant 0 : i32
    return %arg0, %c0_i32, %c0_i32_0 : i32, i32, i32
  }
  func.func @transform_1(%arg0: i32) -> (i32, i32) {
    %c0_i32 = arith.constant 0 : i32
    %c0_i32_0 = arith.constant 0 : i32
    %c0_i32_1 = arith.constant 0 : i32
    return %c0_i32, %c0_i32_0 : i32, i32
  }
  func.func @transform_2(%arg0: i32) -> (i32, i32) {
    %c0_i32 = arith.constant 0 : i32
    %c0_i32_0 = arith.constant 0 : i32
    %c0_i32_1 = arith.constant 0 : i32
    return %c0_i32, %c0_i32_0 : i32, i32
  }
  func.func @transform_3(%arg0: i32) -> (i32, i32, i32) {
    %c0_i32 = arith.constant 0 : i32
    %c0_i32_0 = arith.constant 0 : i32
    %c0_i32_1 = arith.constant 0 : i32
    return %arg0, %c0_i32, %c0_i32_0 : i32, i32, i32
  }
}

</mosaic_0001>

<llo_original>
// kernel: tpu_custom_call.1
$region0: #{tpu_custom_call.1}
  #allocation0 [shape = 'u32[]', space=smem, size = 0x4, offset = 0x4, fixed_abs, tag = 'smem constant byte address 0x4 - core index']
  #allocation1 [shape = 'u32[144,128]{1,0:T(1,128)}', space=vmem, size = 0x12000, scoped, tag = 'internal scratch']
  %s0 = inlined_call_operand.hbm [shape: f32[2,8,256], index: 0, kind: input, shape index: {}]
  %s1 = inlined_call_operand.vmem [shape: f32[8,2], index: 1, kind: input, shape index: {}]
  %s2 = inlined_call_operand.vmem [shape: f32[2,8], index: 2, kind: input, shape index: {}]
  %s3 = inlined_call_operand.hbm [shape: f32[2,8,256], index: 3, kind: output, shape index: {}]
  %s4 = sld [smem:[#allocation0]]
  $region26: #{tpu_custom_call.1} parent=0
    _
  %s6 = ssub.s32 1, %s4
  %s7 = scalar_select 0, %s6, %s4
  $region1: #{tpu_custom_call.1} parent=0
    #allocation2 [shape = 'u8[16384]{0}', space=vmem, size = 0x4000, scoped, tag = 'input window, operand 0, single buffered']
    #allocation3 [shape = 's32[1]{0}', space=sflag, size = 0x4, scoped, tag = 'scoped memory for tpu_custom_call.1']
    #allocation4 [shape = 's32[1]{0}', space=sflag, size = 0x4, scoped, tag = 'scoped memory for tpu_custom_call.1']
    #allocation5 [shape = 'u8[16384]{0}', space=vmem, size = 0x4000, scoped, tag = 'output window, operand 0, single buffered']
    %8 = vsyncpa [#allocation3], 0
    %9 = vsyncpa [#allocation4], 0
    // Predicated region
    $region2: #{tpu_custom_call.1} parent=1 // pred_check
      _
    $region3: #{tpu_custom_call.1} parent=1 // pred_check_branch
      %11 = sbr.rel (0) target = $region5
    $region4: #{tpu_custom_call.1} parent=1 // pred_region
      %s13 = ssub.s32 512, 512
      %14 = vsyncadd [#allocation3], %s13
      %s15 = sshll.u32 [#allocation2], 4
      %s16 = int_to_ptr.vmem [resolvable:$true] %s15
      %21 = dma.hbm_to_vmem [thread:$0]  %s0, 512, %s16, [#allocation3], 256, 256, 16
    $region5: #{tpu_custom_call.1} parent=1 // pred_fallthru
      _
    // Predicated region
    $region6: #{tpu_custom_call.1} parent=1 // pred_check
      _
    $region7: #{tpu_custom_call.1} parent=1 // pred_check_branch
      %23 = sbr.rel (0) target = $region9
    $region8: #{tpu_custom_call.1} parent=1 // pred_region
      _
    $region9: #{tpu_custom_call.1} parent=1 // pred_fallthru
      _
    // Predicated region
    $region10: #{tpu_custom_call.1} parent=1 // pred_check
      _
    $region11: #{tpu_custom_call.1} parent=1 // pred_check_branch
      %25 = sbr.rel (0) target = $region13
    $region12: #{tpu_custom_call.1} parent=1 // pred_region
      _
    $region13: #{tpu_custom_call.1} parent=1 // pred_fallthru
      _
    // Predicated region
    $region14: #{tpu_custom_call.1} parent=1 // pred_check
      _
    $region15: #{tpu_custom_call.1} parent=1 // pred_check_branch
      %27 = sbr.rel (0) target = $region17
    $region16: #{tpu_custom_call.1} parent=1 // pred_region
      %28 = dma.done [#allocation3], 512
    $region17: #{tpu_custom_call.1} parent=1 // pred_fallthru
      _
    %v29 = vld [vmem:[#allocation2] sm:$0xff]
    %v30 = vld [vmem:[#allocation2 + $0x8] sm:$0xff]
    %v31 = vld [vmem:[#allocation2 + $0x10] sm:$0xff]
    %v32 = vld [vmem:[#allocation2 + $0x18] sm:$0xff]
    %v33 = vadd.f32 %v29, %v30
    %34 = vadd.xlane.f32.xlu0 %v33
    %v35 = vpop.xlane.xlu0 %34
    %v36 = vadd.f32 %v31, %v32
    %37 = vadd.xlane.f32.xlu0 %v36
    %v38 = vpop.xlane.xlu0 %37
    %v39 = vmul.f32 %v35, 0.00390625
    %v40 = vmul.f32 %v38, 0.00390625
    %v41 = vld [vmem:[%s1] sm:$0xff]
    %v44 = vlaneseq
    %v45 = vand.u32 %v44, 127
    %v46 = vlaneseq
    %v47 = vshrl.u32 %v46, 7
    %v48 = vsub.s32 %v45, %v47
    %v49 = vrot.slane %v39, %v48
    %v50 = vlaneseq
    %v51 = vshrl.u32 %v50, 7
    %v52 = vsub.s32 %v45, %v51
    %v53 = vrot.slane %v40, %v52
    %vm54 = vcmask 1041409
    %v55 = vsel %vm54, %v53, %v49
    %vm56 = vcmask 64512
    %v57 = vsel %vm56, %v55, 0
    %59 = vmatprep.subr.mxu0 0.0
    %60 = vmatpush1.msra.mxu0 0.0
    %61 = vmatprep.subr.mxu0 0.0
    %62 = vmatpush1.msra.mxu0 0.0
    %63 = vmatprep.subr.mxu0 0.0
    %64 = vmatpush1.msra.mxu0 0.0
    %65 = vmatprep.subr.mxu0 0.0
    %66 = vmatpush1.msra.mxu0 0.0
    %67 = vmatprep.subr.mxu0 0.0
    %68 = vmatpush1.msra.mxu0 0.0
    %69 = vmatprep.subr.mxu0 0.0
    %70 = vmatpush1.msra.mxu0 0.0
    %71 = vmatprep.subr.mxu0 0.0
    %72 = vmatpush1.msra.mxu0 0.0
    %73 = vmatprep.subr.mxu0 0.0
    %74 = vmatpush1.msra.mxu0 0.0
    %75 = vmatprep.subr.mxu0 0.0
    %76 = vmatpush1.msra.mxu0 0.0
    %77 = vmatprep.subr.mxu0 0.0
    %78 = vmatpush1.msra.mxu0 0.0
    %79 = vmatprep.subr.mxu0 0.0
    %80 = vmatpush1.msra.mxu0 0.0
    %81 = vmatprep.subr.mxu0 0.0
    %82 = vmatpush1.msra.mxu0 0.0
    %83 = vmatprep.subr.mxu0 0.0
    %84 = vmatpush1.msra.mxu0 0.0
    %85 = vmatprep.subr.mxu0 0.0
    %86 = vmatpush1.msra.mxu0 0.0
    %87 = vmatprep.subr.mxu0 0.0
    %88 = vmatpush1.msra.mxu0 0.0
    %89 = vmatprep.subr.mxu0 0.0
    %90 = vmatpush1.msra.mxu0 %v41
    %91 = vmatprep.subr.mxu0 0.0
    %92 = vmatpush2.msra.mxu0 0.0
    %93 = vmatprep.subr.mxu0 0.0
    %94 = vmatpush2.msra.mxu0 0.0
    %95 = vmatprep.subr.mxu0 0.0
    %96 = vmatpush2.msra.mxu0 0.0
    %97 = vmatprep.subr.mxu0 0.0
    %98 = vmatpush2.msra.mxu0 0.0
    %99 = vmatprep.subr.mxu0 0.0
    %100 = vmatpush2.msra.mxu0 0.0
    %101 = vmatprep.subr.mxu0 0.0
    %102 = vmatpush2.msra.mxu0 0.0
    %103 = vmatprep.subr.mxu0 0.0
    %104 = vmatpush2.msra.mxu0 0.0
    %105 = vmatprep.subr.mxu0 0.0
    %106 = vmatpush2.msra.mxu0 0.0
    %107 = vmatprep.subr.mxu0 0.0
    %108 = vmatpush2.msra.mxu0 0.0
    %109 = vmatprep.subr.mxu0 0.0
    %110 = vmatpush2.msra.mxu0 0.0
    %111 = vmatprep.subr.mxu0 0.0
    %112 = vmatpush2.msra.mxu0 0.0
    %113 = vmatprep.subr.mxu0 0.0
    %114 = vmatpush2.msra.mxu0 0.0
    %115 = vmatprep.subr.mxu0 0.0
    %116 = vmatpush2.msra.mxu0 0.0
    %117 = vmatprep.subr.mxu0 0.0
    %118 = vmatpush2.msra.mxu0 0.0
    %119 = vmatprep.subr.mxu0 0.0
    %120 = vmatpush2.msra.mxu0 0.0
    %121 = vmatprep.subr.mxu0 0.0
    %122 = vmatpush2.msra.mxu0 0.0
    %123 = vmatprep.mubr.f32.mxu0 0.0
    %124 = vmatmul.mubr.f32.gmra.mxu0 %v57
    %v125 = vpop.f32.mrf.mxu0
    %v126 = vadd.f32 0.0, %v125
    %v127 = vpop.f32.mrf.mxu0
    %128 = vdwg.mxu0
    %v129 = vmax.f32 %v126, 0.0
    %v130 = vld [vmem:[%s2] sm:$0x3]
    %vm131 = vcmask 15360
    %v133 = vsel %vm131, %v129, 0
    %vm135 = vcmask 1041408
    %v137 = vsel %vm135, %v130, 0
    %139 = vmatprep.subr.mxu0 0.0
    %140 = vmatpush1.msra.mxu0 0.0
    %141 = vmatprep.subr.mxu0 0.0
    %142 = vmatpush1.msra.mxu0 0.0
    %143 = vmatprep.subr.mxu0 0.0
    %144 = vmatpush1.msra.mxu0 0.0
    %145 = vmatprep.subr.mxu0 0.0
    %146 = vmatpush1.msra.mxu0 0.0
    %147 = vmatprep.subr.mxu0 0.0
    %148 = vmatpush1.msra.mxu0 0.0
    %149 = vmatprep.subr.mxu0 0.0
    %150 = vmatpush1.msra.mxu0 0.0
    %151 = vmatprep.subr.mxu0 0.0
    %152 = vmatpush1.msra.mxu0 0.0
    %153 = vmatprep.subr.mxu0 0.0
    %154 = vmatpush1.msra.mxu0 0.0
    %155 = vmatprep.subr.mxu0 0.0
    %156 = vmatpush1.msra.mxu0 0.0
    %157 = vmatprep.subr.mxu0 0.0
    %158 = vmatpush1.msra.mxu0 0.0
    %159 = vmatprep.subr.mxu0 0.0
    %160 = vmatpush1.msra.mxu0 0.0
    %161 = vmatprep.subr.mxu0 0.0
    %162 = vmatpush1.msra.mxu0 0.0
    %163 = vmatprep.subr.mxu0 0.0
    %164 = vmatpush1.msra.mxu0 0.0
    %165 = vmatprep.subr.mxu0 0.0
    %166 = vmatpush1.msra.mxu0 0.0
    %167 = vmatprep.subr.mxu0 0.0
    %168 = vmatpush1.msra.mxu0 0.0
    %169 = vmatprep.subr.mxu0 0.0
    %170 = vmatpush1.msra.mxu0 %v137
    %171 = vmatprep.subr.mxu0 0.0
    %172 = vmatpush2.msra.mxu0 0.0
    %173 = vmatprep.subr.mxu0 0.0
    %174 = vmatpush2.msra.mxu0 0.0
    %175 = vmatprep.subr.mxu0 0.0
    %176 = vmatpush2.msra.mxu0 0.0
    %177 = vmatprep.subr.mxu0 0.0
    %178 = vmatpush2.msra.mxu0 0.0
    %179 = vmatprep.subr.mxu0 0.0
    %180 = vmatpush2.msra.mxu0 0.0
    %181 = vmatprep.subr.mxu0 0.0
    %182 = vmatpush2.msra.mxu0 0.0
    %183 = vmatprep.subr.mxu0 0.0
    %184 = vmatpush2.msra.mxu0 0.0
    %185 = vmatprep.subr.mxu0 0.0
    %186 = vmatpush2.msra.mxu0 0.0
    %187 = vmatprep.subr.mxu0 0.0
    %188 = vmatpush2.msra.mxu0 0.0
    %189 = vmatprep.subr.mxu0 0.0
    %190 = vmatpush2.msra.mxu0 0.0
    %191 = vmatprep.subr.mxu0 0.0
    %192 = vmatpush2.msra.mxu0 0.0
    %193 = vmatprep.subr.mxu0 0.0
    %194 = vmatpush2.msra.mxu0 0.0
    %195 = vmatprep.subr.mxu0 0.0
    %196 = vmatpush2.msra.mxu0 0.0
    %197 = vmatprep.subr.mxu0 0.0
    %198 = vmatpush2.msra.mxu0 0.0
    %199 = vmatprep.subr.mxu0 0.0
    %200 = vmatpush2.msra.mxu0 0.0
    %201 = vmatprep.subr.mxu0 0.0
    %202 = vmatpush2.msra.mxu0 0.0
    %203 = vmatprep.mubr.f32.mxu0 0.0
    %204 = vmatmul.mubr.f32.gmra.mxu0 %v133
    %v205 = vpop.f32.mrf.mxu0
    %v206 = vadd.f32 3.0, %v205
    %v207 = vpop.f32.mrf.mxu0
    %208 = vdwg.mxu0
    %v209 = vmax.f32 %v206, 0.0
    %v210 = vmin.f32 %v209, 6.0
    %v211 = vmul.f32 %v210, 0.16666667
    %v212 = vlaneseq
    %v213 = vshrl.u32 %v212, 7
    %v214 = vsub.s32 0, %v213
    %v215 = vrot.slane %v211, %v214
    %217 = vbcast.lane.b32.xlu0 %v215, 256
    %v218 = vpop.permute.xlu0 %217
    %v219 = vlaneseq
    %v220 = vshrl.u32 %v219, 7
    %v221 = vsub.s32 1, %v220
    %v222 = vrot.slane %v211, %v221
    %224 = vbcast.lane.b32.xlu0 %v222, 256
    %v225 = vpop.permute.xlu0 %224
    %v226 = vmul.f32 %v29, %v218
    %v227 = vmul.f32 %v30, %v218
    %v228 = vmul.f32 %v31, %v225
    %v229 = vmul.f32 %v32, %v225
    %230 = vst [vmem:[#allocation5] sm:$0xff] %v226
    %231 = vst [vmem:[#allocation5 + $0x8] sm:$0xff] %v227
    %232 = vst [vmem:[#allocation5 + $0x10] sm:$0xff] %v228
    %233 = vst [vmem:[#allocation5 + $0x18] sm:$0xff] %v229
    // Predicated region
    $region18: #{tpu_custom_call.1} parent=1 // pred_check
      _
    $region19: #{tpu_custom_call.1} parent=1 // pred_check_branch
      %235 = sbr.rel (0) target = $region21
    $region20: #{tpu_custom_call.1} parent=1 // pred_region
      %s237 = ssub.s32 512, 512
      %238 = vsyncadd [#allocation4], %s237
      %s239 = sshll.u32 [#allocation5], 4
      %s240 = int_to_ptr.vmem [resolvable:$true] %s239
      %245 = dma.vmem_to_hbm [thread:$0]  %s240, 512, %s3, [#allocation4], 256, 256, 16
    $region21: #{tpu_custom_call.1} parent=1 // pred_fallthru
      _
    // Predicated region
    $region22: #{tpu_custom_call.1} parent=1 // pred_check
      _
    $region23: #{tpu_custom_call.1} parent=1 // pred_check_branch
      %247 = sbr.rel (0) target = $region25
    $region24: #{tpu_custom_call.1} parent=1 // pred_region
      %248 = dma.done [#allocation4], 512
    $region25: #{tpu_custom_call.1} parent=1 // pred_fallthru
      _
    %249 = vsyncpa [#allocation3], 1
    %250 = vsyncpa [#allocation4], 1

</llo_original>
